<compile_context>
chip_gen: v6e
topology: v6e:2x2x1
jax: 0.10.0
libtpu: 0.0.40
codegen_flags: <defaults>
</compile_context>

<pallas_src>
import functools

import jax
import jax.numpy as jnp
from jax.experimental import pallas as pl
from jax.experimental.pallas import tpu as pltpu


def _round_up(x, m):
    return (x + m - 1) // m * m


def _choose_tb(B, K, V, budget_bytes=16 * 1024 * 1024):
    """Pick the batch-rows-per-grid-step tile, budgeted against VMEM.

    Keeps double-buffered inputs (bf16 Og + Dg tiles) around `budget_bytes`
    (well under v7x's 64 MiB physical VMEM / 32 MiB scoped default, let alone
    v5e/v6e's 128 MiB), rounds TB to a multiple of 128 so the (K, TB) output
    stays lane-dense, caps at 2048, and keeps >= 2 grid steps when the batch
    allows so dimension_semantics=("parallel",) can split across v7x's 2 TCs.
    Realistic DBOW dims (V ~ 100-300, K ~ 8-32) always fit this budget.
    """
    b8 = _round_up(B, 8)
    if b8 <= 128:
        # Single grid step; all block dims equal the full (padded) array extents.
        return b8
    per_row = 2 * V * (K + 1) + 4 * K          # bf16 Og+Dg rows + f32 out column
    tb = max(128, (budget_bytes // (2 * per_row)) // 128 * 128)
    tb = min(tb, 2048)
    if B > 256:
        tb = min(tb, _round_up((B + 1) // 2, 128))   # keep >= 2 steps (megacore)
    tb = min(tb, _round_up(B, 128))
    return max(tb, 128)


def _dbow_kernel(d_ref, og_ref, out_ref):
    # d_ref:   VMEM (TB, V)     bf16 -> D[doc_ids[b], :] rows for this batch tile
    # og_ref:  VMEM (K, TB, V)  bf16 -> O_T[target_noise_ids[b, k], :] rows, k-major
    # out_ref: VMEM (K, TB)     f32  -> scores, batch on the 128-lane axis
    d = d_ref[...].astype(jnp.float32)                      # (TB, V) f32
    K = out_ref.shape[0]
    for k in range(K):                                      # small static K, unrolled
        # Bounded (TB, V) f32 temp per k (no (TB, K, V) f32 slab), VPU multiply
        # + XLU lane-axis reduce over V; per-row store avoids a final transpose.
        prod = og_ref[k].astype(jnp.float32) * d            # (TB, V) f32
        out_ref[k] = jnp.sum(prod, axis=-1)                 # (TB,) lane-dense row


@functools.partial(jax.jit, static_argnames=())
def dbow_forward(D, O_T, doc_ids, target_noise_ids):
    """Pallas DBOW forward.

    D:   (num_docs, vec_dim) f32   -- paragraph-vector table (module's _D)
    O_T: (num_words, vec_dim) f32  -- output embedding stored ROW-MAJOR, i.e.
         the module's _O (vec_dim, num_words) transposed ONCE up front.
    doc_ids: (B,) int32
    target_noise_ids: (B, K) int32
    returns scores: (B, K) f32
    """
    B, K = target_noise_ids.shape
    V = D.shape[1]

    TB = _choose_tb(B, K, V)
    B_pad = _round_up(B, TB)

    # Pad the tiny int index arrays (id 0), not the gathered slabs: the gathers
    # emit the padded shapes directly.  Padded rows hold garbage scores (row 0
    # of the tables) and are sliced off at the end.
    doc_ids_p = jnp.pad(doc_ids, (0, B_pad - B))
    tn_p = jnp.pad(target_noise_ids, ((0, B_pad - B), (0, 0)))

    # Row gathers in bf16 (HBM-bandwidth-bound; f32 accumulation in-kernel).
    # NOTE: like all XLA gathers, out-of-range ids clamp rather than raise.
    Dg = D[doc_ids_p].astype(jnp.bfloat16)                   # (B_pad, V)
    # Gather with transposed (tiny) indices so the slab is produced directly in
    # (K, B_pad, V) order — no transpose/copy of the big array is materialized.
    Og = O_T[tn_p.T].astype(jnp.bfloat16)                    # (K, B_pad, V)
    # For very large V (>= ~256) the gather could instead be fused in-kernel via
    # scalar-prefetched ids + manual DMA from HBM (memory_space=pl.ANY); at the
    # small V typical of DBOW the per-row DMAs would be below the efficient
    # DMA granule, so the XLA gather is kept.

    grid_spec = pltpu.PrefetchScalarGridSpec(
        num_scalar_prefetch=0,
        grid=(B_pad // TB,),
        in_specs=[
            # Last dims equal full array extents -> no HBM zero-padding of V.
            pl.BlockSpec((TB, V), lambda i: (i, 0)),
            pl.BlockSpec((K, TB, V), lambda i: (0, i, 0)),
        ],
        # Output is (K, B_pad): batch on the lane axis -> full-width stores.
        out_specs=pl.BlockSpec((K, TB), lambda i: (0, i)),
    )

    out_t = pl.pallas_call(
        _dbow_kernel,
        out_shape=jax.ShapeDtypeStruct((K, B_pad), jnp.float32),
        grid_spec=grid_spec,
        compiler_params=pltpu.CompilerParams(
            # Batch tiles are fully independent -> shard across TCs on v7x.
            dimension_semantics=("parallel",),
            # Explicit limit: >= our ~16 MiB double-buffered budget, < v7x's
            # 64 MiB physical VMEM (and far under v5e/v6e's 128 MiB).
            vmem_limit_bytes=48 * 1024 * 1024,
        ),
    )(Dg, Og)

    # Tiny (K, B) -> (B, K) transpose back in the wrapper; drops padded rows.
    return out_t[:, :B].T


def _run_case(key, vec_dim, num_docs, num_words, batch, num_noise_words):
    k_d, k_o, k_doc, k_tgt = jax.random.split(key, 4)
    K = num_noise_words + 1

    # Parameters (shapes per DBOW.__init__).  NOTE: the module zero-inits _O;
    # small random values are used here so the numerical check is non-trivial.
    D = jax.random.normal(k_d, (num_docs, vec_dim), dtype=jnp.float32)
    O = 0.1 * jax.random.normal(k_o, (vec_dim, num_words), dtype=jnp.float32)
    # One-time layout conversion of the output embedding (kept/updated in this
    # layout by the training loop; NOT re-done per forward call).
    O_T = jnp.asarray(O.T)

    doc_ids = jax.random.randint(k_doc, (batch,), 0, num_docs, dtype=jnp.int32)
    target_noise_ids = jax.random.randint(
        k_tgt, (batch, K), 0, num_words, dtype=jnp.int32
    )

    scores = dbow_forward(D, O_T, doc_ids, target_noise_ids)
    scores = jax.block_until_ready(scores)

    # Reference of torch.bmm(D[doc_ids].unsqueeze(1), O[:, ids].permute(1,0,2)).squeeze(),
    # computed with the same bf16-rounded operands the kernel reads (f32 accumulation).
    Dbf = D.astype(jnp.bfloat16).astype(jnp.float32)
    Obf = O.astype(jnp.bfloat16).astype(jnp.float32)
    ref = jnp.einsum(
        "bv,bkv->bk",
        Dbf[doc_ids],
        jnp.swapaxes(Obf, 0, 1)[target_noise_ids],
        precision=jax.lax.Precision.HIGHEST,
    )

    assert scores.shape == (batch, K), scores.shape
    assert jnp.allclose(scores, ref, atol=1e-4, rtol=1e-4), (
        float(jnp.max(jnp.abs(scores - ref)))
    )


if __name__ == "__main__":
    key = jax.random.PRNGKey(0)
    k1, k2 = jax.random.split(key)

    # Small case (single grid step, TB == B_pad path).
    _run_case(k1, vec_dim=32, num_docs=16, num_words=64, batch=4, num_noise_words=7)

    # Slightly larger case exercising the multi-step grid / 128-multiple TB path
    # with an unpadded, non-128 V.
    _run_case(k2, vec_dim=96, num_docs=64, num_words=1000, batch=300, num_noise_words=7)

    print("KERNEL_OK")
</pallas_src>

<mosaic_0001>
module attributes {stable_mosaic.version = 11 : i64} {
  func.func @_dbow_kernel(%arg0: i32, %arg1: memref<8x32xbf16, #tpu.memory_space<vmem>>, %arg2: memref<8x8x32xbf16, #tpu.memory_space<vmem>>, %arg3: memref<8x8xf32, #tpu.memory_space<vmem>>) attributes {dimension_semantics = [#tpu.dimension_semantics<parallel>], iteration_bounds = array<i64: 1>, scalar_prefetch = 0 : i64, scratch_operands = 0 : i64, tpu.core_type = #tpu.core_type<tc>, window_params = [{transform_indices = @transform_0, window_bounds = array<i64: 8, 32>}, {transform_indices = @transform_1, window_bounds = array<i64: 8, 8, 32>}, {transform_indices = @transform_2, window_bounds = array<i64: 8, 8>}]} {
    %c0 = arith.constant 0 : index
    %c0_0 = arith.constant 0 : index
    %0 = vector.load %arg1[%c0, %c0_0] : memref<8x32xbf16, #tpu.memory_space<vmem>>, vector<8x32xbf16>
    %1 = arith.extf %0 : vector<8x32xbf16> to vector<8x32xf32>
    %c0_1 = arith.constant 0 : index
    %c0_2 = arith.constant 0 : index
    %c0_3 = arith.constant 0 : index
    %2 = vector.load %arg2[%c0_1, %c0_2, %c0_3] : memref<8x8x32xbf16, #tpu.memory_space<vmem>>, vector<1x8x32xbf16>
    %3 = vector.shape_cast %2 : vector<1x8x32xbf16> to vector<8x32xbf16>
    %4 = arith.extf %3 : vector<8x32xbf16> to vector<8x32xf32>
    %5 = arith.mulf %4, %1 : vector<8x32xf32>
    %cst = arith.constant dense<0.000000e+00> : vector<8xf32>
    %6 = vector.multi_reduction <add>, %5, %cst [1] : vector<8x32xf32> to vector<8xf32>
    %c0_4 = arith.constant 0 : index
    %c0_5 = arith.constant 0 : index
    %7 = vector.load %arg3[%c0_4, %c0_5] : memref<8x8xf32, #tpu.memory_space<vmem>>, vector<1x8xf32>
    %8 = vector.shape_cast %7 : vector<1x8xf32> to vector<8xf32>
    %9 = vector.shape_cast %6 : vector<8xf32> to vector<1x8xf32>
    tpu.vector_store %arg3[%c0_4, %c0_5], %9 {strides = array<i32>} : memref<8x8xf32, #tpu.memory_space<vmem>>, vector<1x8xf32>,
    %c1 = arith.constant 1 : index
    %c0_6 = arith.constant 0 : index
    %c0_7 = arith.constant 0 : index
    %10 = vector.load %arg2[%c1, %c0_6, %c0_7] : memref<8x8x32xbf16, #tpu.memory_space<vmem>>, vector<1x8x32xbf16>
    %11 = vector.shape_cast %10 : vector<1x8x32xbf16> to vector<8x32xbf16>
    %12 = arith.extf %11 : vector<8x32xbf16> to vector<8x32xf32>
    %13 = arith.mulf %12, %1 : vector<8x32xf32>
    %cst_8 = arith.constant dense<0.000000e+00> : vector<8xf32>
    %14 = vector.multi_reduction <add>, %13, %cst_8 [1] : vector<8x32xf32> to vector<8xf32>
    %c1_9 = arith.constant 1 : index
    %c0_10 = arith.constant 0 : index
    %15 = vector.load %arg3[%c1_9, %c0_10] : memref<8x8xf32, #tpu.memory_space<vmem>>, vector<1x8xf32>
    %16 = vector.shape_cast %15 : vector<1x8xf32> to vector<8xf32>
    %17 = vector.shape_cast %14 : vector<8xf32> to vector<1x8xf32>
    tpu.vector_store %arg3[%c1_9, %c0_10], %17 {strides = array<i32>} : memref<8x8xf32, #tpu.memory_space<vmem>>, vector<1x8xf32>,
    %c2 = arith.constant 2 : index
    %c0_11 = arith.constant 0 : index
    %c0_12 = arith.constant 0 : index
    %18 = vector.load %arg2[%c2, %c0_11, %c0_12] : memref<8x8x32xbf16, #tpu.memory_space<vmem>>, vector<1x8x32xbf16>
    %19 = vector.shape_cast %18 : vector<1x8x32xbf16> to vector<8x32xbf16>
    %20 = arith.extf %19 : vector<8x32xbf16> to vector<8x32xf32>
    %21 = arith.mulf %20, %1 : vector<8x32xf32>
    %cst_13 = arith.constant dense<0.000000e+00> : vector<8xf32>
    %22 = vector.multi_reduction <add>, %21, %cst_13 [1] : vector<8x32xf32> to vector<8xf32>
    %c2_14 = arith.constant 2 : index
    %c0_15 = arith.constant 0 : index
    %23 = vector.load %arg3[%c2_14, %c0_15] : memref<8x8xf32, #tpu.memory_space<vmem>>, vector<1x8xf32>
    %24 = vector.shape_cast %23 : vector<1x8xf32> to vector<8xf32>
    %25 = vector.shape_cast %22 : vector<8xf32> to vector<1x8xf32>
    tpu.vector_store %arg3[%c2_14, %c0_15], %25 {strides = array<i32>} : memref<8x8xf32, #tpu.memory_space<vmem>>, vector<1x8xf32>,
    %c3 = arith.constant 3 : index
    %c0_16 = arith.constant 0 : index
    %c0_17 = arith.constant 0 : index
    %26 = vector.load %arg2[%c3, %c0_16, %c0_17] : memref<8x8x32xbf16, #tpu.memory_space<vmem>>, vector<1x8x32xbf16>
    %27 = vector.shape_cast %26 : vector<1x8x32xbf16> to vector<8x32xbf16>
    %28 = arith.extf %27 : vector<8x32xbf16> to vector<8x32xf32>
    %29 = arith.mulf %28, %1 : vector<8x32xf32>
    %cst_18 = arith.constant dense<0.000000e+00> : vector<8xf32>
    %30 = vector.multi_reduction <add>, %29, %cst_18 [1] : vector<8x32xf32> to vector<8xf32>
    %c3_19 = arith.constant 3 : index
    %c0_20 = arith.constant 0 : index
    %31 = vector.load %arg3[%c3_19, %c0_20] : memref<8x8xf32, #tpu.memory_space<vmem>>, vector<1x8xf32>
    %32 = vector.shape_cast %31 : vector<1x8xf32> to vector<8xf32>
    %33 = vector.shape_cast %30 : vector<8xf32> to vector<1x8xf32>
    tpu.vector_store %arg3[%c3_19, %c0_20], %33 {strides = array<i32>} : memref<8x8xf32, #tpu.memory_space<vmem>>, vector<1x8xf32>,
    %c4 = arith.constant 4 : index
    %c0_21 = arith.constant 0 : index
    %c0_22 = arith.constant 0 : index
    %34 = vector.load %arg2[%c4, %c0_21, %c0_22] : memref<8x8x32xbf16, #tpu.memory_space<vmem>>, vector<1x8x32xbf16>
    %35 = vector.shape_cast %34 : vector<1x8x32xbf16> to vector<8x32xbf16>
    %36 = arith.extf %35 : vector<8x32xbf16> to vector<8x32xf32>
    %37 = arith.mulf %36, %1 : vector<8x32xf32>
    %cst_23 = arith.constant dense<0.000000e+00> : vector<8xf32>
    %38 = vector.multi_reduction <add>, %37, %cst_23 [1] : vector<8x32xf32> to vector<8xf32>
    %c4_24 = arith.constant 4 : index
    %c0_25 = arith.constant 0 : index
    %39 = vector.load %arg3[%c4_24, %c0_25] : memref<8x8xf32, #tpu.memory_space<vmem>>, vector<1x8xf32>
    %40 = vector.shape_cast %39 : vector<1x8xf32> to vector<8xf32>
    %41 = vector.shape_cast %38 : vector<8xf32> to vector<1x8xf32>
    tpu.vector_store %arg3[%c4_24, %c0_25], %41 {strides = array<i32>} : memref<8x8xf32, #tpu.memory_space<vmem>>, vector<1x8xf32>,
    %c5 = arith.constant 5 : index
    %c0_26 = arith.constant 0 : index
    %c0_27 = arith.constant 0 : index
    %42 = vector.load %arg2[%c5, %c0_26, %c0_27] : memref<8x8x32xbf16, #tpu.memory_space<vmem>>, vector<1x8x32xbf16>
    %43 = vector.shape_cast %42 : vector<1x8x32xbf16> to vector<8x32xbf16>
    %44 = arith.extf %43 : vector<8x32xbf16> to vector<8x32xf32>
    %45 = arith.mulf %44, %1 : vector<8x32xf32>
    %cst_28 = arith.constant dense<0.000000e+00> : vector<8xf32>
    %46 = vector.multi_reduction <add>, %45, %cst_28 [1] : vector<8x32xf32> to vector<8xf32>
    %c5_29 = arith.constant 5 : index
    %c0_30 = arith.constant 0 : index
    %47 = vector.load %arg3[%c5_29, %c0_30] : memref<8x8xf32, #tpu.memory_space<vmem>>, vector<1x8xf32>
    %48 = vector.shape_cast %47 : vector<1x8xf32> to vector<8xf32>
    %49 = vector.shape_cast %46 : vector<8xf32> to vector<1x8xf32>
    tpu.vector_store %arg3[%c5_29, %c0_30], %49 {strides = array<i32>} : memref<8x8xf32, #tpu.memory_space<vmem>>, vector<1x8xf32>,
    %c6 = arith.constant 6 : index
    %c0_31 = arith.constant 0 : index
    %c0_32 = arith.constant 0 : index
    %50 = vector.load %arg2[%c6, %c0_31, %c0_32] : memref<8x8x32xbf16, #tpu.memory_space<vmem>>, vector<1x8x32xbf16>
    %51 = vector.shape_cast %50 : vector<1x8x32xbf16> to vector<8x32xbf16>
    %52 = arith.extf %51 : vector<8x32xbf16> to vector<8x32xf32>
    %53 = arith.mulf %52, %1 : vector<8x32xf32>
    %cst_33 = arith.constant dense<0.000000e+00> : vector<8xf32>
    %54 = vector.multi_reduction <add>, %53, %cst_33 [1] : vector<8x32xf32> to vector<8xf32>
    %c6_34 = arith.constant 6 : index
    %c0_35 = arith.constant 0 : index
    %55 = vector.load %arg3[%c6_34, %c0_35] : memref<8x8xf32, #tpu.memory_space<vmem>>, vector<1x8xf32>
    %56 = vector.shape_cast %55 : vector<1x8xf32> to vector<8xf32>
    %57 = vector.shape_cast %54 : vector<8xf32> to vector<1x8xf32>
    tpu.vector_store %arg3[%c6_34, %c0_35], %57 {strides = array<i32>} : memref<8x8xf32, #tpu.memory_space<vmem>>, vector<1x8xf32>,
    %c7 = arith.constant 7 : index
    %c0_36 = arith.constant 0 : index
    %c0_37 = arith.constant 0 : index
    %58 = vector.load %arg2[%c7, %c0_36, %c0_37] : memref<8x8x32xbf16, #tpu.memory_space<vmem>>, vector<1x8x32xbf16>
    %59 = vector.shape_cast %58 : vector<1x8x32xbf16> to vector<8x32xbf16>
    %60 = arith.extf %59 : vector<8x32xbf16> to vector<8x32xf32>
    %61 = arith.mulf %60, %1 : vector<8x32xf32>
    %cst_38 = arith.constant dense<0.000000e+00> : vector<8xf32>
    %62 = vector.multi_reduction <add>, %61, %cst_38 [1] : vector<8x32xf32> to vector<8xf32>
    %c7_39 = arith.constant 7 : index
    %c0_40 = arith.constant 0 : index
    %63 = vector.load %arg3[%c7_39, %c0_40] : memref<8x8xf32, #tpu.memory_space<vmem>>, vector<1x8xf32>
    %64 = vector.shape_cast %63 : vector<1x8xf32> to vector<8xf32>
    %65 = vector.shape_cast %62 : vector<8xf32> to vector<1x8xf32>
    tpu.vector_store %arg3[%c7_39, %c0_40], %65 {strides = array<i32>} : memref<8x8xf32, #tpu.memory_space<vmem>>, vector<1x8xf32>,
    return
  }
  func.func @transform_0(%arg0: i32) -> (i32, i32) {
    %c0_i32 = arith.constant 0 : i32
    %c0_i32_0 = arith.constant 0 : i32
    return %arg0, %c0_i32 : i32, i32
  }
  func.func @transform_1(%arg0: i32) -> (i32, i32, i32) {
    %c0_i32 = arith.constant 0 : i32
    %c0_i32_0 = arith.constant 0 : i32
    %c0_i32_1 = arith.constant 0 : i32
    return %c0_i32, %arg0, %c0_i32_0 : i32, i32, i32
  }
  func.func @transform_2(%arg0: i32) -> (i32, i32) {
    %c0_i32 = arith.constant 0 : i32
    %c0_i32_0 = arith.constant 0 : i32
    return %c0_i32, %arg0 : i32, i32
  }
}

</mosaic_0001>

<llo_original>
// kernel: dbow_forward.1
$region0: #{dbow_forward.1}
  #allocation0 [shape = 'u32[]', space=smem, size = 0x4, offset = 0x4, fixed_abs, tag = 'smem constant byte address 0x4 - core index']
  #allocation1 [shape = 'u32[144,128]{1,0:T(1,128)}', space=vmem, size = 0x12000, scoped, tag = 'internal scratch']
  %s0 = inlined_call_operand.vmem [shape: bf16[8,32], index: 0, kind: input, shape index: {}]
  %s1 = inlined_call_operand.vmem [shape: bf16[8,8,32], index: 1, kind: input, shape index: {}]
  %s2 = inlined_call_operand.vmem [shape: f32[8,8], index: 2, kind: output, shape index: {}]
  %s3 = sld [smem:[#allocation0]]
  $region18: #{dbow_forward.1} parent=0
    _
  %s5 = ssub.s32 1, %s3
  %s6 = scalar_select 0, %s5, %s3
  // Predicated region
  $region2: #{dbow_forward.1} parent=0 // pred_check
    _
  $region3: #{dbow_forward.1} parent=0 // pred_check_branch
    %8 = sbr.rel (0) target = $region5
  $region4: #{dbow_forward.1} parent=0 // pred_region
    _
  $region5: #{dbow_forward.1} parent=0 // pred_fallthru
    _
  // Predicated region
  $region6: #{dbow_forward.1} parent=0 // pred_check
    _
  $region7: #{dbow_forward.1} parent=0 // pred_check_branch
    %10 = sbr.rel (0) target = $region9
  $region8: #{dbow_forward.1} parent=0 // pred_region
    _
  $region9: #{dbow_forward.1} parent=0 // pred_fallthru
    _
  %v11 = vld [vmem:[%s0] sm:$0xf]
  %v12 = vunpack.c.l.bf16 %v11
  %v13 = vld [vmem:[%s1] sm:$0xf]
  %v14 = vunpack.c.l.bf16 %v13
  %v15 = vmul.f32 %v14, %v12
  %vm16 = vcmask 261120
  %v17 = vsel %vm16, %v15, 0.0
  %18 = vadd.xlane.f32.xlu0 %v17
  %v19 = vpop.xlane.xlu0 %18
  %v21 = vlaneseq
  %v22 = vand.u32 %v21, 127
  %v23 = vlaneseq
  %v24 = vshrl.u32 %v23, 7
  %v25 = vsub.s32 %v22, %v24
  %v26 = vrot.slane %v19, %v25
  %vm28 = vcmask 57344
  %29 = vst.msk [vmem:[%s2] sm:$0x1] %vm28, %v26
  %s30 = scalar_lea.vmem %s1, 4
  %v31 = vld [vmem:[%s30] sm:$0xf]
  %v32 = vunpack.c.l.bf16 %v31
  %v33 = vmul.f32 %v32, %v12
  %v34 = vsel %vm16, %v33, 0.0
  %35 = vadd.xlane.f32.xlu0 %v34
  %v36 = vpop.xlane.xlu0 %35
  %v38 = vlaneseq
  %v39 = vshrl.u32 %v38, 7
  %v40 = vsub.s32 %v22, %v39
  %v41 = vrot.slane %v36, %v40
  %43 = vst.msk [vmem:[%s2 + $0x1] sm:$0x1] %vm28, %v41
  %s44 = scalar_lea.vmem %s1, 8
  %v45 = vld [vmem:[%s44] sm:$0xf]
  %v46 = vunpack.c.l.bf16 %v45
  %v47 = vmul.f32 %v46, %v12
  %v48 = vsel %vm16, %v47, 0.0
  %49 = vadd.xlane.f32.xlu0 %v48
  %v50 = vpop.xlane.xlu0 %49
  %v52 = vlaneseq
  %v53 = vshrl.u32 %v52, 7
  %v54 = vsub.s32 %v22, %v53
  %v55 = vrot.slane %v50, %v54
  %57 = vst.msk [vmem:[%s2 + $0x2] sm:$0x1] %vm28, %v55
  %s58 = scalar_lea.vmem %s1, 12
  %v59 = vld [vmem:[%s58] sm:$0xf]
  %v60 = vunpack.c.l.bf16 %v59
  %v61 = vmul.f32 %v60, %v12
  %v62 = vsel %vm16, %v61, 0.0
  %63 = vadd.xlane.f32.xlu0 %v62
  %v64 = vpop.xlane.xlu0 %63
  %v66 = vlaneseq
  %v67 = vshrl.u32 %v66, 7
  %v68 = vsub.s32 %v22, %v67
  %v69 = vrot.slane %v64, %v68
  %71 = vst.msk [vmem:[%s2 + $0x3] sm:$0x1] %vm28, %v69
  %s72 = scalar_lea.vmem %s1, 16
  %v73 = vld [vmem:[%s72] sm:$0xf]
  %v74 = vunpack.c.l.bf16 %v73
  %v75 = vmul.f32 %v74, %v12
  %v76 = vsel %vm16, %v75, 0.0
  %77 = vadd.xlane.f32.xlu0 %v76
  %v78 = vpop.xlane.xlu0 %77
  %v80 = vlaneseq
  %v81 = vshrl.u32 %v80, 7
  %v82 = vsub.s32 %v22, %v81
  %v83 = vrot.slane %v78, %v82
  %85 = vst.msk [vmem:[%s2 + $0x4] sm:$0x1] %vm28, %v83
  %s86 = scalar_lea.vmem %s1, 20
  %v87 = vld [vmem:[%s86] sm:$0xf]
  %v88 = vunpack.c.l.bf16 %v87
  %v89 = vmul.f32 %v88, %v12
  %v90 = vsel %vm16, %v89, 0.0
  %91 = vadd.xlane.f32.xlu0 %v90
  %v92 = vpop.xlane.xlu0 %91
  %v94 = vlaneseq
  %v95 = vshrl.u32 %v94, 7
  %v96 = vsub.s32 %v22, %v95
  %v97 = vrot.slane %v92, %v96
  %99 = vst.msk [vmem:[%s2 + $0x5] sm:$0x1] %vm28, %v97
  %s100 = scalar_lea.vmem %s1, 24
  %v101 = vld [vmem:[%s100] sm:$0xf]
  %v102 = vunpack.c.l.bf16 %v101
  %v103 = vmul.f32 %v102, %v12
  %v104 = vsel %vm16, %v103, 0.0
  %105 = vadd.xlane.f32.xlu0 %v104
  %v106 = vpop.xlane.xlu0 %105
  %v108 = vlaneseq
  %v109 = vshrl.u32 %v108, 7
  %v110 = vsub.s32 %v22, %v109
  %v111 = vrot.slane %v106, %v110
  %113 = vst.msk [vmem:[%s2 + $0x6] sm:$0x1] %vm28, %v111
  %s114 = scalar_lea.vmem %s1, 28
  %v115 = vld [vmem:[%s114] sm:$0xf]
  %v116 = vunpack.c.l.bf16 %v115
  %v117 = vmul.f32 %v116, %v12
  %v118 = vsel %vm16, %v117, 0.0
  %119 = vadd.xlane.f32.xlu0 %v118
  %v120 = vpop.xlane.xlu0 %119
  %v122 = vlaneseq
  %v123 = vshrl.u32 %v122, 7
  %v124 = vsub.s32 %v22, %v123
  %v125 = vrot.slane %v120, %v124
  %127 = vst.msk [vmem:[%s2 + $0x7] sm:$0x1] %vm28, %v125
  // Predicated region
  $region10: #{dbow_forward.1} parent=0 // pred_check
    _
  $region11: #{dbow_forward.1} parent=0 // pred_check_branch
    %129 = sbr.rel (0) target = $region13
  $region12: #{dbow_forward.1} parent=0 // pred_region
    _
  $region13: #{dbow_forward.1} parent=0 // pred_fallthru
    _
  // Predicated region
  $region14: #{dbow_forward.1} parent=0 // pred_check
    _
  $region15: #{dbow_forward.1} parent=0 // pred_check_branch
    %131 = sbr.rel (0) target = $region17
  $region16: #{dbow_forward.1} parent=0 // pred_region
    _
  $region17: #{dbow_forward.1} parent=0 // pred_fallthru
    _

</llo_original>
